<compile_context>
chip_gen: v6e
topology: v6e:2x2x1
jax: 0.10.0
libtpu: 0.0.40
codegen_flags: <defaults>
</compile_context>

<pallas_src>
import functools

import jax
import jax.numpy as jnp
from jax.experimental import pallas as pl
from jax.experimental.pallas import tpu as pltpu

LANE = 128
TM_MAX = 8192                       # rows per tile -> 4 MiB f32 per input tile
VMEM_LIMIT_BYTES = 32 * 1024 * 1024


def _num_tensorcores():
    """2 on multi-TensorCore chips (v4/v5p/v7x), else 1 (v5e/v6e)."""
    try:
        kind = jax.devices()[0].device_kind.lower()
    except Exception:
        return 1
    return 2 if ("v7" in kind or "v5p" in kind or "v4" in kind) else 1


def _focal_terms(x, t, gamma):
    """Per-element focal term (1 - pt)**gamma * BCE, computed in f32."""
    x = x.astype(jnp.float32)
    t = t.astype(jnp.float32)
    # Numerically-stable BCE-with-logits (same formula PyTorch uses):
    #   max(x, 0) - x*t + log(1 + exp(-|x|))
    bce = jnp.maximum(x, 0.0) - x * t + jnp.log1p(jnp.exp(-jnp.abs(x)))
    # TODO(synk): for strictly-binary targets, pt can be built from exp(-|x|)
    # and pl.reciprocal instead of a third transcendental (EUP win on v7x).
    pt = jnp.exp(-bce)
    one_m_pt = 1.0 - pt
    if gamma == 2:                  # default path: plain multiply, no pow
        w = one_m_pt * one_m_pt
    elif gamma == 1:
        w = one_m_pt
    elif gamma == 0:
        w = jnp.ones_like(one_m_pt)
    else:                           # float gamma: clamp so log(0) can't NaN
        w = jnp.maximum(one_m_pt, 1e-30) ** gamma
    return w * bce


def _focal_kernel(x_ref, t_ref, o_ref, *, gamma, m_rows, tm, blocks_per_core,
                  needs_mask):
    c = pl.program_id(0)            # core / parallel index
    j = pl.program_id(1)            # reduction step within this core

    @pl.when(j == 0)
    def _init():
        o_ref[...] = jnp.zeros_like(o_ref)   # o_ref is the resident accumulator

    f = _focal_terms(x_ref[...], t_ref[...], gamma)

    def _fold(v):
        # Sublane fold (tm, 128) -> (8, 128): pure vreg-to-vreg VALU adds.
        return v.reshape(tm // 8, 8, LANE).sum(axis=0)

    if not needs_mask:
        # Steady state: no mask math at all.
        o_ref[...] += _fold(f)
    else:
        lb = c * blocks_per_core + j                  # logical row-block index
        valid_rows = m_rows - lb * tm                 # rows of this block in range
        is_interior = valid_rows >= tm

        @pl.when(is_interior)
        def _interior():
            o_ref[...] += _fold(f)

        @pl.when(jnp.logical_not(is_interior))
        def _boundary():
            # Runs at most once per core: partial last block or clamped
            # overflow step (valid_rows <= 0 -> everything masked).
            row = jax.lax.broadcasted_iota(jnp.int32, (tm, LANE), 0)
            o_ref[...] += _fold(jnp.where(row < valid_rows, f, 0.0))


def focal_loss(inputs, targets, gamma=2):
    """Mean focal loss over all elements (matches FocalLoss.forward)."""
    x = inputs.reshape(-1)
    t = targets.reshape(-1)
    n = int(x.shape[0])
    if n == 0:                      # torch mean of empty is NaN
        return jnp.float32(jnp.nan)

    n_aligned = (n // LANE) * LANE
    m_rows = n_aligned // LANE
    total = jnp.float32(0.0)

    if m_rows > 0:
        xa = x if n_aligned == n else x[:n_aligned]
        ta = t if n_aligned == n else t[:n_aligned]
        x2 = xa.reshape(m_rows, LANE)        # 128-aligned -> metadata reshape
        t2 = ta.reshape(m_rows, LANE)

        tm = min(TM_MAX, ((m_rows + 7) // 8) * 8)    # multiple of 8 sublanes
        n_blocks = pl.cdiv(m_rows, tm)
        num_cores = min(_num_tensorcores(), n_blocks)
        blocks_per_core = pl.cdiv(n_blocks, num_cores)
        last_block = n_blocks - 1
        needs_mask = (m_rows % tm != 0) or (num_cores * blocks_per_core > n_blocks)

        def in_map(c, j):
            # Clamp so over-assigned steps re-read the last block; their
            # contribution is zeroed by the in-kernel row mask.
            return (jnp.minimum(c * blocks_per_core + j, last_block), 0)

        out = pl.pallas_call(
            functools.partial(_focal_kernel, gamma=gamma, m_rows=m_rows, tm=tm,
                              blocks_per_core=blocks_per_core,
                              needs_mask=needs_mask),
            out_shape=jax.ShapeDtypeStruct((num_cores, 8, LANE), jnp.float32),
            grid=(num_cores, blocks_per_core),
            in_specs=[
                pl.BlockSpec((tm, LANE), in_map),   # logits tile
                pl.BlockSpec((tm, LANE), in_map),   # targets tile
            ],
            out_specs=pl.BlockSpec((None, 8, LANE), lambda c, j: (c, 0, 0)),
            compiler_params=pltpu.CompilerParams(
                dimension_semantics=("parallel", "arbitrary"),
                vmem_limit_bytes=VMEM_LIMIT_BYTES),
        )(x2, t2)
        total = total + out.sum()    # per-core (8,128) partials -> scalar

    if n_aligned < n:
        # <128-element ragged tail folded in with plain jnp (no pad copy).
        total = total + _focal_terms(x[n_aligned:], t[n_aligned:], gamma).sum()

    return total / n


def _focal_loss_ref(inputs, targets, gamma=2):
    return jnp.mean(_focal_terms(inputs.reshape(-1), targets.reshape(-1), gamma))


if __name__ == "__main__":
    key = jax.random.PRNGKey(0)
    k1, k2, k3, k4 = jax.random.split(key, 4)

    # Detection-style NCHW logits and binary targets (128-aligned case).
    inputs = jax.random.normal(k1, (2, 4, 16, 16), dtype=jnp.float32)
    targets = (jax.random.uniform(k2, (2, 4, 16, 16)) > 0.5).astype(jnp.float32)

    loss = jax.block_until_ready(focal_loss(inputs, targets, gamma=2))
    ref = _focal_loss_ref(inputs, targets, gamma=2)
    assert jnp.allclose(loss, ref, rtol=1e-5, atol=1e-6), (loss, ref)

    # Non-128-aligned size exercises the boundary-mask path + wrapper tail.
    inputs2 = jax.random.normal(k3, (2, 3, 7, 5), dtype=jnp.float32)
    targets2 = (jax.random.uniform(k4, (2, 3, 7, 5)) > 0.5).astype(jnp.float32)
    loss2 = jax.block_until_ready(focal_loss(inputs2, targets2, gamma=2))
    ref2 = _focal_loss_ref(inputs2, targets2, gamma=2)
    assert jnp.allclose(loss2, ref2, rtol=1e-5, atol=1e-6), (loss2, ref2)

    print("KERNEL_OK")
</pallas_src>

<mosaic_0001>
module attributes {stable_mosaic.version = 11 : i64} {
  func.func @_focal_kernel(%arg0: i32, %arg1: i32, %arg2: memref<16x128xf32, #tpu.memory_space<vmem>>, %arg3: memref<16x128xf32, #tpu.memory_space<vmem>>, %arg4: memref<1x8x128xf32, #tpu.memory_space<vmem>>) attributes {dimension_semantics = [#tpu.dimension_semantics<parallel>, #tpu.dimension_semantics<arbitrary>], iteration_bounds = array<i64: 1, 1>, scalar_prefetch = 0 : i64, scratch_operands = 0 : i64, tpu.core_type = #tpu.core_type<tc>, window_params = [{transform_indices = @transform_0, window_bounds = array<i64: 16, 128>}, {transform_indices = @transform_1, window_bounds = array<i64: 16, 128>}, {transform_indices = @transform_2, window_bounds = array<i64: 1, 8, 128>}]} {
    %c0_i32 = arith.constant 0 : i32
    %0 = arith.cmpi eq, %arg1, %c0_i32 : i32
    %1 = arith.extui %0 : i1 to i32
    %c0_i32_0 = arith.constant 0 : i32
    %2 = arith.cmpi ne, %1, %c0_i32_0 : i32
    scf.if %2 {
      %cst_14 = arith.constant 0.000000e+00 : f32
      %30 = vector.broadcast %cst_14 : f32 to vector<8x128xf32>
      %c0_15 = arith.constant 0 : index
      %c0_16 = arith.constant 0 : index
      %c0_17 = arith.constant 0 : index
      %31 = vector.load %arg4[%c0_15, %c0_16, %c0_17] : memref<1x8x128xf32, #tpu.memory_space<vmem>>, vector<1x8x128xf32>
      %32 = vector.shape_cast %31 : vector<1x8x128xf32> to vector<8x128xf32>
      %33 = vector.shape_cast %30 : vector<8x128xf32> to vector<1x8x128xf32>
      tpu.vector_store %arg4[%c0_15, %c0_16, %c0_17], %33 {strides = array<i32>} : memref<1x8x128xf32, #tpu.memory_space<vmem>>, vector<1x8x128xf32>,
    } else {
    }
    %c0 = arith.constant 0 : index
    %c0_1 = arith.constant 0 : index
    %3 = vector.load %arg2[%c0, %c0_1] : memref<16x128xf32, #tpu.memory_space<vmem>>, vector<16x128xf32>
    %c0_2 = arith.constant 0 : index
    %c0_3 = arith.constant 0 : index
    %4 = vector.load %arg3[%c0_2, %c0_3] : memref<16x128xf32, #tpu.memory_space<vmem>>, vector<16x128xf32>
    %cst = arith.constant 0.000000e+00 : f32
    %5 = vector.broadcast %cst : f32 to vector<16x128xf32>
    %6 = arith.maximumf %3, %5 : vector<16x128xf32>
    %7 = arith.mulf %3, %4 : vector<16x128xf32>
    %8 = arith.subf %6, %7 : vector<16x128xf32>
    %9 = math.absf %3 : vector<16x128xf32>
    %cst_4 = arith.constant 0.000000e+00 : f32
    %10 = vector.broadcast %cst_4 : f32 to vector<16x128xf32>
    %11 = arith.subf %10, %9 : vector<16x128xf32>
    %12 = math.exp %11 : vector<16x128xf32>
    %13 = math.log1p %12 : vector<16x128xf32>
    %14 = arith.addf %8, %13 : vector<16x128xf32>
    %cst_5 = arith.constant 0.000000e+00 : f32
    %15 = vector.broadcast %cst_5 : f32 to vector<16x128xf32>
    %16 = arith.subf %15, %14 : vector<16x128xf32>
    %17 = math.exp %16 : vector<16x128xf32>
    %cst_6 = arith.constant 1.000000e+00 : f32
    %18 = vector.broadcast %cst_6 : f32 to vector<16x128xf32>
    %19 = arith.subf %18, %17 : vector<16x128xf32>
    %20 = arith.mulf %19, %19 : vector<16x128xf32>
    %21 = arith.mulf %20, %14 : vector<16x128xf32>
    %c0_7 = arith.constant 0 : index
    %c0_8 = arith.constant 0 : index
    %c0_9 = arith.constant 0 : index
    %22 = vector.load %arg4[%c0_7, %c0_8, %c0_9] : memref<1x8x128xf32, #tpu.memory_space<vmem>>, vector<1x8x128xf32>
    %23 = vector.shape_cast %22 : vector<1x8x128xf32> to vector<8x128xf32>
    %24 = vector.shape_cast %21 : vector<16x128xf32> to vector<2x8x128xf32>
    %cst_10 = arith.constant dense<0.000000e+00> : vector<8x128xf32>
    %25 = vector.multi_reduction <add>, %24, %cst_10 [0] : vector<2x8x128xf32> to vector<8x128xf32>
    %26 = arith.addf %23, %25 : vector<8x128xf32>
    %c0_11 = arith.constant 0 : index
    %c0_12 = arith.constant 0 : index
    %c0_13 = arith.constant 0 : index
    %27 = vector.load %arg4[%c0_11, %c0_12, %c0_13] : memref<1x8x128xf32, #tpu.memory_space<vmem>>, vector<1x8x128xf32>
    %28 = vector.shape_cast %27 : vector<1x8x128xf32> to vector<8x128xf32>
    %29 = vector.shape_cast %26 : vector<8x128xf32> to vector<1x8x128xf32>
    tpu.vector_store %arg4[%c0_11, %c0_12, %c0_13], %29 {strides = array<i32>} : memref<1x8x128xf32, #tpu.memory_space<vmem>>, vector<1x8x128xf32>,
    return
  }
  func.func @transform_0(%arg0: i32, %arg1: i32) -> (i32, i32) {
    %c1_i32 = arith.constant 1 : i32
    %0 = arith.muli %arg0, %c1_i32 : i32
    %1 = arith.addi %0, %arg1 : i32
    %c0_i32 = arith.constant 0 : i32
    %2 = arith.minsi %1, %c0_i32 : i32
    %c0_i32_0 = arith.constant 0 : i32
    %c0_i32_1 = arith.constant 0 : i32
    return %2, %c0_i32_0 : i32, i32
  }
  func.func @transform_1(%arg0: i32, %arg1: i32) -> (i32, i32) {
    %c1_i32 = arith.constant 1 : i32
    %0 = arith.muli %arg0, %c1_i32 : i32
    %1 = arith.addi %0, %arg1 : i32
    %c0_i32 = arith.constant 0 : i32
    %2 = arith.minsi %1, %c0_i32 : i32
    %c0_i32_0 = arith.constant 0 : i32
    %c0_i32_1 = arith.constant 0 : i32
    return %2, %c0_i32_0 : i32, i32
  }
  func.func @transform_2(%arg0: i32, %arg1: i32) -> (i32, i32, i32) {
    %c0_i32 = arith.constant 0 : i32
    %c0_i32_0 = arith.constant 0 : i32
    %c0_i32_1 = arith.constant 0 : i32
    return %arg0, %c0_i32, %c0_i32_0 : i32, i32, i32
  }
}

</mosaic_0001>

<llo_original>
// kernel: tpu_custom_call.1
$region0: #{tpu_custom_call.1}
  #allocation0 [shape = 'u32[]', space=smem, size = 0x4, offset = 0x4, fixed_abs, tag = 'smem constant byte address 0x4 - core index']
  #allocation1 [shape = 'u32[144,128]{1,0:T(1,128)}', space=vmem, size = 0x12000, scoped, tag = 'internal scratch']
  %s0 = inlined_call_operand.hbm [shape: f32[16,128], index: 0, kind: input, shape index: {}]
  %s1 = inlined_call_operand.hbm [shape: f32[16,128], index: 1, kind: input, shape index: {}]
  %s2 = inlined_call_operand.hbm [shape: f32[1,8,128], index: 2, kind: output, shape index: {}]
  %s3 = sld [smem:[#allocation0]]
  $region30: #{tpu_custom_call.1} parent=0
    _
  %s5 = ssub.s32 1, %s3
  %s6 = scalar_select 0, %s5, %s3
  $region1: #{tpu_custom_call.1} parent=0
    #allocation2 [shape = 'u8[8192]{0}', space=vmem, size = 0x2000, scoped, tag = 'input window, operand 0, single buffered']
    #allocation3 [shape = 's32[1]{0}', space=sflag, size = 0x4, scoped, tag = 'scoped memory for tpu_custom_call.1']
    #allocation4 [shape = 's32[1]{0}', space=sflag, size = 0x4, scoped, tag = 'scoped memory for tpu_custom_call.1']
    #allocation5 [shape = 'u8[8192]{0}', space=vmem, size = 0x2000, scoped, tag = 'input window, operand 1, single buffered']
    #allocation6 [shape = 's32[1]{0}', space=sflag, size = 0x4, scoped, tag = 'scoped memory for tpu_custom_call.1']
    #allocation7 [shape = 'u8[4096]{0}', space=vmem, size = 0x1000, scoped, tag = 'output window, operand 0, single buffered']
    %7 = vsyncpa [#allocation3], 0
    %8 = vsyncpa [#allocation6], 0
    %9 = vsyncpa [#allocation4], 0
    // Predicated region
    $region2: #{tpu_custom_call.1} parent=1 // pred_check
      _
    $region3: #{tpu_custom_call.1} parent=1 // pred_check_branch
      %11 = sbr.rel (0) target = $region5
    $region4: #{tpu_custom_call.1} parent=1 // pred_region
      %s12 = sadd.s32 0, 0
      %p13 = scmp.lt.s32.totalorder %s12, 0
      %s14 = scalar_select %p13, %s12, 0
      %s15 = smul.u32 2, %s14
      %s17 = ssub.s32 256, 256
      %18 = vsyncadd [#allocation3], %s17
      %s19 = smul.addr %s15, 128
      %s20 = scalar_lea.hbm %s0, %s19
      %s21 = sshll.u32 [#allocation2], 4
      %s22 = int_to_ptr.vmem [resolvable:$true] %s21
      %27 = dma.hbm_to_vmem [thread:$0]  %s20, 256, %s22, [#allocation3], 128, 128, 8
    $region5: #{tpu_custom_call.1} parent=1 // pred_fallthru
      _
    // Predicated region
    $region6: #{tpu_custom_call.1} parent=1 // pred_check
      _
    $region7: #{tpu_custom_call.1} parent=1 // pred_check_branch
      %29 = sbr.rel (0) target = $region9
    $region8: #{tpu_custom_call.1} parent=1 // pred_region
      %s30 = sadd.s32 0, 0
      %p31 = scmp.lt.s32.totalorder %s30, 0
      %s32 = scalar_select %p31, %s30, 0
      %s33 = smul.u32 2, %s32
      %s35 = ssub.s32 256, 256
      %36 = vsyncadd [#allocation6], %s35
      %s37 = smul.addr %s33, 128
      %s38 = scalar_lea.hbm %s1, %s37
      %s39 = sshll.u32 [#allocation5], 4
      %s40 = int_to_ptr.vmem [resolvable:$true] %s39
      %45 = dma.hbm_to_vmem [thread:$0]  %s38, 256, %s40, [#allocation6], 128, 128, 8
    $region9: #{tpu_custom_call.1} parent=1 // pred_fallthru
      _
    // Predicated region
    $region10: #{tpu_custom_call.1} parent=1 // pred_check
      _
    $region11: #{tpu_custom_call.1} parent=1 // pred_check_branch
      %47 = sbr.rel (0) target = $region13
    $region12: #{tpu_custom_call.1} parent=1 // pred_region
      %48 = dma.done [#allocation3], 256
    $region13: #{tpu_custom_call.1} parent=1 // pred_fallthru
      _
    // Predicated region
    $region14: #{tpu_custom_call.1} parent=1 // pred_check
      _
    $region15: #{tpu_custom_call.1} parent=1 // pred_check_branch
      %50 = sbr.rel (0) target = $region17
    $region16: #{tpu_custom_call.1} parent=1 // pred_region
      %51 = dma.done [#allocation6], 256
    $region17: #{tpu_custom_call.1} parent=1 // pred_fallthru
      _
    %s52 = sadd.s32 0, 0
    %p53 = scmp.lt.s32.totalorder %s52, 0
    %s54 = scalar_select %p53, %s52, 0
    %s55 = smul.u32 2, %s54
    %s56 = sadd.s32 0, 0
    %p57 = scmp.lt.s32.totalorder %s56, 0
    %s58 = scalar_select %p57, %s56, 0
    %s59 = smul.u32 2, %s58
    %p60 = scmp.eq.s32.totalorder 0, 0
    // Predicated region
    $region18: #{tpu_custom_call.1} parent=1 // pred_check
      %p61 = pneg %p60
    $region19: #{tpu_custom_call.1} parent=1 // pred_check_branch
      %63 = sbr.rel (%p61) target = $region21
    $region20: #{tpu_custom_call.1} parent=1 // pred_region
      %64 = vst [vmem:[#allocation7] sm:$0xff] 0.0
    $region21: #{tpu_custom_call.1} parent=1 // pred_fallthru
      _
    %v65 = vld [vmem:[#allocation2] sm:$0xff]
    %v66 = vld [vmem:[#allocation2 + $0x8] sm:$0xff]
    %v67 = vld [vmem:[#allocation5] sm:$0xff]
    %v68 = vld [vmem:[#allocation5 + $0x8] sm:$0xff]
    %v69 = vmax.f32 %v65, 0.0
    %v70 = vmax.f32 %v66, 0.0
    %v71 = vmul.f32 %v65, %v67
    %v72 = vmul.f32 %v66, %v68
    %v73 = vsub.f32 %v69, %v71
    %v74 = vsub.f32 %v70, %v72
    %v75 = vand.u32 2147483647, %v65
    %v76 = vand.u32 2147483647, %v66
    %v77 = vsub.f32 0.0, %v75
    %v78 = vsub.f32 0.0, %v76
    %v79 = vmul.f32 %v77, 1.442695
    %v80 = vpow.pop %v79
    %v81 = vmul.f32 %v78, 1.442695
    %v82 = vpow.pop %v81
    %v83 = vadd.f32 %v80, 1.0
    %v84 = vlog2.pop %v83
    %v85 = vmul.f32 %v84, 0.6931472
    %v86 = vmul.f32 -0.5, %v80
    %v87 = vadd.f32 %v86, 1.0
    %v88 = vmul.f32 %v87, %v80
    %v89 = vand.u32 2147483647, %v80
    %vm90 = vcmp.lt.f32.partialorder %v89, 0.0004427343
    %v91 = vsel %vm90, %v88, %v85
    %v92 = vadd.f32 %v82, 1.0
    %v93 = vlog2.pop %v92
    %v94 = vmul.f32 %v93, 0.6931472
    %v95 = vmul.f32 -0.5, %v82
    %v96 = vadd.f32 %v95, 1.0
    %v97 = vmul.f32 %v96, %v82
    %v98 = vand.u32 2147483647, %v82
    %vm99 = vcmp.lt.f32.partialorder %v98, 0.0004427343
    %v100 = vsel %vm99, %v97, %v94
    %v101 = vadd.f32 %v73, %v91
    %v102 = vadd.f32 %v74, %v100
    %v103 = vsub.f32 0.0, %v101
    %v104 = vsub.f32 0.0, %v102
    %v105 = vmul.f32 %v103, 1.442695
    %v106 = vpow.pop %v105
    %v107 = vmul.f32 %v104, 1.442695
    %v108 = vpow.pop %v107
    %v109 = vsub.f32 1.0, %v106
    %v110 = vsub.f32 1.0, %v108
    %v111 = vmul.f32 %v109, %v109
    %v112 = vmul.f32 %v110, %v110
    %v113 = vmul.f32 %v111, %v101
    %v114 = vmul.f32 %v112, %v102
    %v115 = vld [vmem:[#allocation7] sm:$0xff]
    %v116 = vadd.f32 %v113, %v114
    %v117 = vadd.f32 %v115, %v116
    %118 = vst [vmem:[#allocation7] sm:$0xff] %v117
    // Predicated region
    $region22: #{tpu_custom_call.1} parent=1 // pred_check
      _
    $region23: #{tpu_custom_call.1} parent=1 // pred_check_branch
      %120 = sbr.rel (0) target = $region25
    $region24: #{tpu_custom_call.1} parent=1 // pred_region
      %s122 = ssub.s32 128, 128
      %123 = vsyncadd [#allocation4], %s122
      %s125 = sshll.u32 [#allocation7], 4
      %s126 = int_to_ptr.vmem [resolvable:$true] %s125
      %128 = dma.vmem_to_hbm [thread:$0]  %s126, 128, %s2, [#allocation4]
    $region25: #{tpu_custom_call.1} parent=1 // pred_fallthru
      _
    // Predicated region
    $region26: #{tpu_custom_call.1} parent=1 // pred_check
      _
    $region27: #{tpu_custom_call.1} parent=1 // pred_check_branch
      %130 = sbr.rel (0) target = $region29
    $region28: #{tpu_custom_call.1} parent=1 // pred_region
      %131 = dma.done [#allocation4], 128
    $region29: #{tpu_custom_call.1} parent=1 // pred_fallthru
      _
    %132 = vsyncpa [#allocation3], 1
    %133 = vsyncpa [#allocation6], 1
    %134 = vsyncpa [#allocation4], 1

</llo_original>
